<compile_context>
chip_gen: v7x
topology: tpu7x:2x2x1
jax: 0.10.0
libtpu: 0.0.40
codegen_flags: <defaults>
</compile_context>

<pallas_src>
import functools

import jax
import jax.numpy as jnp
from jax.experimental import pallas as pl
from jax.experimental.pallas import tpu as pltpu

# TODO(synk): preprocess_net (torch_geometric HAN) + Batch.from_data_list +
# tools.refactor_d_state are graph ops with no Pallas equivalent; the kernel
# starts from the refactored logits tensor.


def _round_up(x, m):
    return (x + m - 1) // m * m


@functools.lru_cache(maxsize=1)
def _tpu_vmem_capacity():
    """Per-core VMEM capacity in bytes, or None if unknown."""
    try:
        return int(pltpu.get_tpu_info().vmem_capacity_bytes)
    except Exception:
        return None


def _pick_hidden_tile(hp, want):
    """Largest multiple of 128 <= want that divides hp (hp % 128 == 0)."""
    want = max(128, min(want, hp))
    for t in range(want // 128, 0, -1):
        if hp % (t * 128) == 0:
            return t * 128
    return 128


def _estimate_vmem(tm, tn, dp, lp, mm_bytes, out_bytes):
    """VMEM footprint estimate, including epilogue temporaries."""
    return (2 * tm * dp * mm_bytes          # x batch tile (double-buffered)
            + 2 * dp * tn * mm_bytes        # W1 hidden-column slab
            + 2 * tn * lp * mm_bytes        # W2 hidden-row slab
            + 2 * (tn + lp) * 4             # f32 biases
            + 2 * tm * lp * out_bytes       # output tile
            + tm * lp * 4                   # f32 accumulator scratch
            + tm * tn * (4 + mm_bytes))     # h (f32) + its MXU-dtype cast


def _critic_kernel(x_ref, w1_ref, b1_ref, w2_ref, b2_ref, o_ref, acc_ref):
    """Fused two-layer MLP, tiled over the *hidden* dimension.

    grid = (batch_tiles, hidden_tiles); the hidden axis (last) carries the
    layer-2 accumulation. Per hidden slab n:
        h_n = relu(x @ W1[:, n] + b1[n]);  acc += h_n @ W2[n, :]
    """
    n = pl.program_id(1)

    @pl.when(n == 0)
    def _():
        acc_ref[...] = jnp.zeros_like(acc_ref)

    # Layer 1 for this hidden slab: MXU matmul with f32 accumulation; bias and
    # ReLU stay in f32 (v5e VPU has no bf16).
    h = jnp.dot(x_ref[...], w1_ref[...], preferred_element_type=jnp.float32)
    h = jnp.maximum(h + b1_ref[...], 0.0)

    # Layer-2 partial product for this slab, accumulated in f32.
    acc_ref[...] += jnp.dot(h.astype(w2_ref.dtype), w2_ref[...],
                            preferred_element_type=jnp.float32)

    @pl.when(n == pl.num_programs(1) - 1)
    def _():
        o_ref[...] = jnp.maximum(acc_ref[...] + b2_ref[...], 0.0
                                 ).astype(o_ref.dtype)


def prepare_critic_params(w1, b1, w2, b2, *, use_bf16=True):
    """Pad + cast the critic weights ONCE (hoisted out of the forward path).

    w1: (D, D), b1: (D,), w2: (D, L), b2: (L,), layout x @ W + b.
    Zero-padding is exact: padded x columns hit zero W1 rows, padded hidden
    units are ReLU(0 + 0) = 0 and hit zero W2 rows, padded output columns are
    sliced off by the wrapper.
    """
    d = w1.shape[0]
    last = w2.shape[1]
    assert w1.shape == (d, d) and b1.shape == (d,)
    assert w2.shape == (d, last) and b2.shape == (last,)
    dp = _round_up(d, 128)
    lp = _round_up(last, 128)          # lane-dense (unmasked vst) output width
    mm_dtype = jnp.bfloat16 if use_bf16 else jnp.float32

    w1p = w1 if dp == d else jnp.pad(w1, ((0, dp - d), (0, dp - d)))
    w2p = w2 if (dp == d and lp == last) else jnp.pad(
        w2, ((0, dp - d), (0, lp - last)))
    b1p = b1 if dp == d else jnp.pad(b1, (0, dp - d))
    b2p = b2 if lp == last else jnp.pad(b2, (0, lp - last))
    return (w1p.astype(mm_dtype),
            b1p.reshape(1, dp).astype(jnp.float32),
            w2p.astype(mm_dtype),
            b2p.reshape(1, lp).astype(jnp.float32))


def global_critics_forward(logits, w1p, b1p, w2p, b2p, *,
                           d, last, batch_tile=512, hidden_tile=512):
    """logits: (B, feat, pending_num, agent_num) -> V(s): (B, last_size).

    NOTE: at toy sizes (demo below) plain XLA would beat the custom call; the
    kernel pays off at production B and D.
    """
    B = logits.shape[0]
    x = logits.reshape(B, -1)                       # flatten(start_dim=1)
    assert x.shape[1] == d, (x.shape, d)
    dp = w1p.shape[0]                               # padded input / hidden dim
    lp = w2p.shape[1]                               # padded output width
    mm_dtype = w1p.dtype
    mm_bytes = jnp.dtype(mm_dtype).itemsize
    out_dtype = logits.dtype
    out_bytes = jnp.dtype(out_dtype).itemsize

    # ---- tile sizing against the per-generation VMEM budget ---------------
    cap = _tpu_vmem_capacity()
    vmem_cap = cap if cap is not None else 64 * 2**20
    budget = int(0.85 * vmem_cap)       # ~54 MiB on v7x, ~109 MiB on v5e/v6e
    two_core = cap is not None and cap <= 64 * 2**20   # v7x: 2 TCs / 64 MiB

    sub = 16 if mm_bytes == 2 else 8    # sublane packing for the MXU dtype
    tm = min(_round_up(batch_tile, sub), _round_up(B, sub))
    tn = _pick_hidden_tile(dp, hidden_tile)

    # Shrink hidden slab first (cheapest), then batch tile, until it fits.
    while (_estimate_vmem(tm, tn, dp, lp, mm_bytes, out_bytes) > budget
           and tn > 128):
        tn = _pick_hidden_tile(dp, tn // 2)
    while (_estimate_vmem(tm, tn, dp, lp, mm_bytes, out_bytes) > budget
           and tm > sub):
        tm = max(sub, _round_up(tm // 2, sub))

    bp = _round_up(B, tm)
    # On 2-TC chips ensure >= 2 batch tiles so the "parallel" axis shards.
    if two_core and bp // tm == 1 and tm >= 2 * sub and (tm // 2) % sub == 0:
        tm //= 2
        bp = _round_up(B, tm)

    est = _estimate_vmem(tm, tn, dp, lp, mm_bytes, out_bytes)
    vmem_limit = int(min(max(2 * est, 32 * 2**20), budget))

    # ---- per-call activation pad/cast (weights already prepared) ----------
    xp = x
    if bp != B or dp != d:
        xp = jnp.pad(x, ((0, bp - B), (0, dp - d)))
    xp = xp.astype(mm_dtype)

    out = pl.pallas_call(
        _critic_kernel,
        out_shape=jax.ShapeDtypeStruct((bp, lp), out_dtype),
        grid_spec=pltpu.PrefetchScalarGridSpec(
            num_scalar_prefetch=0,
            grid=(bp // tm, dp // tn),
            in_specs=[
                pl.BlockSpec((tm, dp), lambda i, n: (i, 0)),   # x batch tile
                pl.BlockSpec((dp, tn), lambda i, n: (0, n)),   # W1 column slab
                pl.BlockSpec((1, tn), lambda i, n: (0, n)),    # b1 slab
                pl.BlockSpec((tn, lp), lambda i, n: (n, 0)),   # W2 row slab
                pl.BlockSpec((1, lp), lambda i, n: (0, 0)),    # b2
            ],
            out_specs=pl.BlockSpec((tm, lp), lambda i, n: (i, 0)),
            scratch_shapes=[pltpu.VMEM((tm, lp), jnp.float32)],
        ),
        compiler_params=pltpu.CompilerParams(
            dimension_semantics=("parallel", "arbitrary"),
            vmem_limit_bytes=vmem_limit),
    )(xp, w1p, b1p, w2p, b2p)

    return out[:B, :last]


def _init_linear(key, fan_in, fan_out, dtype=jnp.float32):
    """Deterministic init mimicking torch.nn.Linear (uniform +/- 1/sqrt(fan_in))."""
    kw, kb = jax.random.split(key)
    bound = 1.0 / jnp.sqrt(jnp.asarray(fan_in, dtype))
    w = jax.random.uniform(kw, (fan_in, fan_out), dtype, -bound, bound)
    b = jax.random.uniform(kb, (fan_out,), dtype, -bound, bound)
    return w, b


def _reference(x, w1, b1, w2, b2):
    h = jnp.maximum(x @ w1 + b1, 0.0)
    return jnp.maximum(h @ w2 + b2, 0.0)


def _reference_bf16(x, w1, b1, w2, b2):
    """Mirrors the kernel's bf16-input / f32-accumulation rounding exactly."""
    xb, w1b, w2b = (a.astype(jnp.bfloat16) for a in (x, w1, w2))
    h = jnp.maximum(
        jnp.dot(xb, w1b, preferred_element_type=jnp.float32) + b1, 0.0)
    y = jnp.dot(h.astype(jnp.bfloat16), w2b,
                preferred_element_type=jnp.float32) + b2
    return jnp.maximum(y, 0.0)


if __name__ == "__main__":
    # Small shapes consistent with the module:
    #   preprocess_net.output_dim = 8, pending_num = 2, agent_num = 2
    #   -> input_dim D = 8 * 2 * 2 = 32; last_size = 1; batch B = 8.
    B, FEAT, PENDING, AGENTS = 8, 8, 2, 2
    D = FEAT * PENDING * AGENTS
    LAST = 1

    key = jax.random.PRNGKey(0)
    k_x, k_l1, k_l2 = jax.random.split(key, 3)

    # Stand-in for tools.refactor_d_state output: (B, feat, pending, agents).
    logits = jax.random.normal(k_x, (B, FEAT, PENDING, AGENTS), jnp.float32)
    w1, b1 = _init_linear(k_l1, D, D)
    w2, b2 = _init_linear(k_l2, D, LAST)
    x = logits.reshape(B, -1)

    fwd = jax.jit(functools.partial(global_critics_forward, d=D, last=LAST))

    # --- f32 path: exact vs f32 reference (tight tolerance) ----------------
    params_f32 = prepare_critic_params(w1, b1, w2, b2, use_bf16=False)
    out_f32 = jax.block_until_ready(fwd(logits, *params_f32))
    ref_f32 = _reference(x, w1, b1, w2, b2)
    assert out_f32.shape == (B, LAST), out_f32.shape
    assert jnp.allclose(out_f32, ref_f32, atol=1e-5, rtol=1e-5), "f32 mismatch"

    # --- bf16 path (the production default): bf16 MXU, f32 accumulation ----
    params_bf16 = prepare_critic_params(w1, b1, w2, b2, use_bf16=True)
    out_bf16 = jax.block_until_ready(fwd(logits, *params_bf16))
    ref_bf16 = _reference_bf16(x, w1, b1, w2, b2)
    assert out_bf16.shape == (B, LAST), out_bf16.shape
    assert jnp.allclose(out_bf16, ref_bf16, atol=1e-2, rtol=1e-2), \
        "bf16 mismatch vs bf16-rounded reference"

    print("KERNEL_OK")
</pallas_src>

<mosaic_0001>
module attributes {stable_mosaic.version = 11 : i64} {
  func.func @_critic_kernel(%arg0: i32, %arg1: i32, %arg2: memref<8x128xf32, #tpu.memory_space<vmem>>, %arg3: memref<128x128xf32, #tpu.memory_space<vmem>>, %arg4: memref<1x128xf32, #tpu.memory_space<vmem>>, %arg5: memref<128x128xf32, #tpu.memory_space<vmem>>, %arg6: memref<1x128xf32, #tpu.memory_space<vmem>>, %arg7: memref<8x128xf32, #tpu.memory_space<vmem>>, %arg8: memref<8x128xf32, #tpu.memory_space<vmem>>) attributes {dimension_semantics = [#tpu.dimension_semantics<parallel>, #tpu.dimension_semantics<arbitrary>], iteration_bounds = array<i64: 1, 1>, scalar_prefetch = 0 : i64, scratch_operands = 1 : i64, tpu.core_type = #tpu.core_type<tc>, window_params = [{transform_indices = @transform_0, window_bounds = array<i64: 8, 128>}, {transform_indices = @transform_1, window_bounds = array<i64: 128, 128>}, {transform_indices = @transform_2, window_bounds = array<i64: 1, 128>}, {transform_indices = @transform_3, window_bounds = array<i64: 128, 128>}, {pipeline_mode = #tpu.pipeline_mode<synchronous>, transform_indices = @transform_4, window_bounds = array<i64: 1, 128>}, {transform_indices = @transform_5, window_bounds = array<i64: 8, 128>}]} {
    %c0_i32 = arith.constant 0 : i32
    %0 = arith.cmpi eq, %arg1, %c0_i32 : i32
    %1 = arith.extui %0 : i1 to i32
    %c0_i32_0 = arith.constant 0 : i32
    %2 = arith.cmpi ne, %1, %c0_i32_0 : i32
    scf.if %2 {
      %cst_16 = arith.constant 0.000000e+00 : f32
      %19 = vector.broadcast %cst_16 : f32 to vector<8x128xf32>
      %c0_17 = arith.constant 0 : index
      %c0_18 = arith.constant 0 : index
      %20 = vector.load %arg8[%c0_17, %c0_18] : memref<8x128xf32, #tpu.memory_space<vmem>>, vector<8x128xf32>
      tpu.vector_store %arg8[%c0_17, %c0_18], %19 {strides = array<i32>} : memref<8x128xf32, #tpu.memory_space<vmem>>, vector<8x128xf32>,
    } else {
    }
    %c0 = arith.constant 0 : index
    %c0_1 = arith.constant 0 : index
    %3 = vector.load %arg2[%c0, %c0_1] : memref<8x128xf32, #tpu.memory_space<vmem>>, vector<8x128xf32>
    %c0_2 = arith.constant 0 : index
    %c0_3 = arith.constant 0 : index
    %4 = vector.load %arg3[%c0_2, %c0_3] : memref<128x128xf32, #tpu.memory_space<vmem>>, vector<128x128xf32>
    %cst = arith.constant dense<0.000000e+00> : vector<8x128xf32>
    %5 = tpu.matmul %3, %4, %cst {dimension_numbers = #tpu.dot_dimension_numbers<[1], [0], [0], [1], [0, 0, 1, 1], [], []>} : vector<8x128xf32>, vector<128x128xf32>, vector<8x128xf32> -> vector<8x128xf32>
    %c0_4 = arith.constant 0 : index
    %c0_5 = arith.constant 0 : index
    %6 = vector.load %arg4[%c0_4, %c0_5] : memref<1x128xf32, #tpu.memory_space<vmem>>, vector<1x128xf32>
    %7 = vector.broadcast %6 : vector<1x128xf32> to vector<8x128xf32>
    %8 = arith.addf %5, %7 : vector<8x128xf32>
    %cst_6 = arith.constant 0.000000e+00 : f32
    %9 = vector.broadcast %cst_6 : f32 to vector<8x128xf32>
    %10 = arith.maximumf %8, %9 : vector<8x128xf32>
    %c0_7 = arith.constant 0 : index
    %c0_8 = arith.constant 0 : index
    %11 = vector.load %arg8[%c0_7, %c0_8] : memref<8x128xf32, #tpu.memory_space<vmem>>, vector<8x128xf32>
    %c0_9 = arith.constant 0 : index
    %c0_10 = arith.constant 0 : index
    %12 = vector.load %arg5[%c0_9, %c0_10] : memref<128x128xf32, #tpu.memory_space<vmem>>, vector<128x128xf32>
    %cst_11 = arith.constant dense<0.000000e+00> : vector<8x128xf32>
    %13 = tpu.matmul %10, %12, %cst_11 {dimension_numbers = #tpu.dot_dimension_numbers<[1], [0], [0], [1], [0, 0, 1, 1], [], []>} : vector<8x128xf32>, vector<128x128xf32>, vector<8x128xf32> -> vector<8x128xf32>
    %14 = arith.addf %11, %13 : vector<8x128xf32>
    %c0_12 = arith.constant 0 : index
    %c0_13 = arith.constant 0 : index
    %15 = vector.load %arg8[%c0_12, %c0_13] : memref<8x128xf32, #tpu.memory_space<vmem>>, vector<8x128xf32>
    tpu.vector_store %arg8[%c0_12, %c0_13], %14 {strides = array<i32>} : memref<8x128xf32, #tpu.memory_space<vmem>>, vector<8x128xf32>,
    %c0_i32_14 = arith.constant 0 : i32
    %16 = arith.cmpi eq, %arg1, %c0_i32_14 : i32
    %17 = arith.extui %16 : i1 to i32
    %c0_i32_15 = arith.constant 0 : i32
    %18 = arith.cmpi ne, %17, %c0_i32_15 : i32
    scf.if %18 {
      %c0_16 = arith.constant 0 : index
      %c0_17 = arith.constant 0 : index
      %19 = vector.load %arg8[%c0_16, %c0_17] : memref<8x128xf32, #tpu.memory_space<vmem>>, vector<8x128xf32>
      %c0_18 = arith.constant 0 : index
      %c0_19 = arith.constant 0 : index
      %20 = vector.load %arg6[%c0_18, %c0_19] : memref<1x128xf32, #tpu.memory_space<vmem>>, vector<1x128xf32>
      %21 = vector.broadcast %20 : vector<1x128xf32> to vector<8x128xf32>
      %22 = arith.addf %19, %21 : vector<8x128xf32>
      %cst_20 = arith.constant 0.000000e+00 : f32
      %23 = vector.broadcast %cst_20 : f32 to vector<8x128xf32>
      %24 = arith.maximumf %22, %23 : vector<8x128xf32>
      %c0_21 = arith.constant 0 : index
      %c0_22 = arith.constant 0 : index
      %25 = vector.load %arg7[%c0_21, %c0_22] : memref<8x128xf32, #tpu.memory_space<vmem>>, vector<8x128xf32>
      tpu.vector_store %arg7[%c0_21, %c0_22], %24 {strides = array<i32>} : memref<8x128xf32, #tpu.memory_space<vmem>>, vector<8x128xf32>,
    } else {
    }
    return
  }
  func.func @transform_0(%arg0: i32, %arg1: i32) -> (i32, i32) {
    %c0_i32 = arith.constant 0 : i32
    %c0_i32_0 = arith.constant 0 : i32
    return %arg0, %c0_i32 : i32, i32
  }
  func.func @transform_1(%arg0: i32, %arg1: i32) -> (i32, i32) {
    %c0_i32 = arith.constant 0 : i32
    %c0_i32_0 = arith.constant 0 : i32
    return %c0_i32, %arg1 : i32, i32
  }
  func.func @transform_2(%arg0: i32, %arg1: i32) -> (i32, i32) {
    %c0_i32 = arith.constant 0 : i32
    %c0_i32_0 = arith.constant 0 : i32
    return %c0_i32, %arg1 : i32, i32
  }
  func.func @transform_3(%arg0: i32, %arg1: i32) -> (i32, i32) {
    %c0_i32 = arith.constant 0 : i32
    %c0_i32_0 = arith.constant 0 : i32
    return %arg1, %c0_i32 : i32, i32
  }
  func.func @transform_4(%arg0: i32, %arg1: i32) -> (i32, i32) {
    %c0_i32 = arith.constant 0 : i32
    %c0_i32_0 = arith.constant 0 : i32
    %c0_i32_1 = arith.constant 0 : i32
    return %c0_i32, %c0_i32_0 : i32, i32
  }
  func.func @transform_5(%arg0: i32, %arg1: i32) -> (i32, i32) {
    %c0_i32 = arith.constant 0 : i32
    %c0_i32_0 = arith.constant 0 : i32
    return %arg0, %c0_i32 : i32, i32
  }
}

</mosaic_0001>

<llo_original>
// kernel: global_critics_forward.1
$region0: #{global_critics_forward.1}
  #allocation0 [shape = 'u32[]', space=smem, size = 0x4, offset = 0x4, fixed_abs, tag = 'smem constant byte address 0x4 - core index']
  #allocation1 [shape = 'u32[144,128]{1,0:T(1,128)}', space=vmem, size = 0x12000, scoped, tag = 'internal scratch']
  #allocation2 [shape = 'f32[8,128]{1,0:T(8,128)}', space=vmem, size = 0x1000, scoped, tag = 'scratch operand']
  %s0 = inlined_call_operand.vmem [shape: f32[8,128], index: 0, kind: input, shape index: {}]
  %s1 = inlined_call_operand.vmem [shape: f32[128,128], index: 1, kind: input, shape index: {}]
  %s2 = inlined_call_operand.vmem [shape: f32[1,128], index: 2, kind: input, shape index: {}]
  %s3 = inlined_call_operand.hbm [shape: f32[128,128], index: 3, kind: input, shape index: {}]
  %s4 = inlined_call_operand.vmem [shape: f32[1,128], index: 4, kind: input, shape index: {}]
  %s5 = inlined_call_operand.vmem [shape: f32[8,128], index: 5, kind: output, shape index: {}]
  %s6 = sld [smem:[#allocation0]]
  $region42: #{global_critics_forward.1} parent=0
    _
  %s8 = ssub.s32 1, %s6
  %s9 = scalar_select 0, %s8, %s6
  $region1: #{global_critics_forward.1} parent=0
    #allocation3 [shape = 'u8[65536]{0}', space=vmem, size = 0x10000, scoped, tag = 'input window, operand 3, single buffered']
    #allocation4 [shape = 's32[1]{0}', space=sflag, size = 0x4, scoped, tag = 'scoped memory for global_critics_forward.1']
    %10 = vsyncpa [#allocation4], 0
    // Predicated region
    $region2: #{global_critics_forward.1} parent=1 // pred_check
      _
    $region3: #{global_critics_forward.1} parent=1 // pred_check_branch
      %12 = sbr.rel (0) target = $region5
    $region4: #{global_critics_forward.1} parent=1 // pred_region
      _
    $region5: #{global_critics_forward.1} parent=1 // pred_fallthru
      _
    // Predicated region
    $region6: #{global_critics_forward.1} parent=1 // pred_check
      _
    $region7: #{global_critics_forward.1} parent=1 // pred_check_branch
      %14 = sbr.rel (0) target = $region9
    $region8: #{global_critics_forward.1} parent=1 // pred_region
      _
    $region9: #{global_critics_forward.1} parent=1 // pred_fallthru
      _
    // Predicated region
    $region10: #{global_critics_forward.1} parent=1 // pred_check
      _
    $region11: #{global_critics_forward.1} parent=1 // pred_check_branch
      %16 = sbr.rel (0) target = $region13
    $region12: #{global_critics_forward.1} parent=1 // pred_region
      _
    $region13: #{global_critics_forward.1} parent=1 // pred_fallthru
      _
    // Predicated region
    $region14: #{global_critics_forward.1} parent=1 // pred_check
      _
    $region15: #{global_critics_forward.1} parent=1 // pred_check_branch
      %18 = sbr.rel (0) target = $region17
    $region16: #{global_critics_forward.1} parent=1 // pred_region
      %s20 = ssub.s32 2048, 2048
      %21 = vsyncadd [#allocation4], %s20
      %s22 = sshll.u32 [#allocation3], 4
      %s23 = int_to_ptr.vmem [resolvable:$true] %s22
      %28 = dma.hbm_to_vmem [thread:$0]  %s3, 2048, %s23, [#allocation4], 128, 128, 8
    $region17: #{global_critics_forward.1} parent=1 // pred_fallthru
      _
    // Predicated region
    $region18: #{global_critics_forward.1} parent=1 // pred_check
      _
    $region19: #{global_critics_forward.1} parent=1 // pred_check_branch
      %30 = sbr.rel (0) target = $region21
    $region20: #{global_critics_forward.1} parent=1 // pred_region
      _
    $region21: #{global_critics_forward.1} parent=1 // pred_fallthru
      _
    // Predicated region
    $region22: #{global_critics_forward.1} parent=1 // pred_check
      _
    $region23: #{global_critics_forward.1} parent=1 // pred_check_branch
      %32 = sbr.rel (0) target = $region25
    $region24: #{global_critics_forward.1} parent=1 // pred_region
      %33 = dma.done [#allocation4], 2048
    $region25: #{global_critics_forward.1} parent=1 // pred_fallthru
      _
    %p34 = scmp.eq.s32.totalorder 0, 0
    // Predicated region
    $region26: #{global_critics_forward.1} parent=1 // pred_check
      %p35 = pneg %p34
    $region27: #{global_critics_forward.1} parent=1 // pred_check_branch
      %37 = sbr.rel (%p35) target = $region29
    $region28: #{global_critics_forward.1} parent=1 // pred_region
      %38 = vst [vmem:[#allocation2] sm:$0xff] 0.0
    $region29: #{global_critics_forward.1} parent=1 // pred_fallthru
      _
    %v39 = vld [vmem:[%s0] sm:$0xff]
    %v40 = vld [vmem:[%s1] sm:$0xff]
    %v41 = vld [vmem:[%s1 + $0x8] sm:$0xff]
    %v42 = vld [vmem:[%s1 + $0x10] sm:$0xff]
    %v43 = vld [vmem:[%s1 + $0x18] sm:$0xff]
    %v44 = vld [vmem:[%s1 + $0x20] sm:$0xff]
    %v45 = vld [vmem:[%s1 + $0x28] sm:$0xff]
    %v46 = vld [vmem:[%s1 + $0x30] sm:$0xff]
    %v47 = vld [vmem:[%s1 + $0x38] sm:$0xff]
    %v48 = vld [vmem:[%s1 + $0x40] sm:$0xff]
    %v49 = vld [vmem:[%s1 + $0x48] sm:$0xff]
    %v50 = vld [vmem:[%s1 + $0x50] sm:$0xff]
    %v51 = vld [vmem:[%s1 + $0x58] sm:$0xff]
    %v52 = vld [vmem:[%s1 + $0x60] sm:$0xff]
    %v53 = vld [vmem:[%s1 + $0x68] sm:$0xff]
    %v54 = vld [vmem:[%s1 + $0x70] sm:$0xff]
    %v55 = vld [vmem:[%s1 + $0x78] sm:$0xff]
    %v56 = vld [vmem:[%s2] sm:$0x1]
    %v58 = vlaneseq
    %v59 = vshrl.u32 %v58, 7
    %v60 = vsub.s32 0, %v59
    %v61 = vrot.slane %v56, %v60
    %63 = vmatprep.subr.mxu0 0.0
    %64 = vmatpush1.msra.mxu0 %v40
    %65 = vmatprep.subr.mxu0 0.0
    %66 = vmatpush1.msra.mxu0 %v41
    %67 = vmatprep.subr.mxu0 0.0
    %68 = vmatpush1.msra.mxu0 %v42
    %69 = vmatprep.subr.mxu0 0.0
    %70 = vmatpush1.msra.mxu0 %v43
    %71 = vmatprep.subr.mxu0 0.0
    %72 = vmatpush1.msra.mxu0 %v44
    %73 = vmatprep.subr.mxu0 0.0
    %74 = vmatpush1.msra.mxu0 %v45
    %75 = vmatprep.subr.mxu0 0.0
    %76 = vmatpush1.msra.mxu0 %v46
    %77 = vmatprep.subr.mxu0 0.0
    %78 = vmatpush1.msra.mxu0 %v47
    %79 = vmatprep.subr.mxu0 0.0
    %80 = vmatpush1.msra.mxu0 %v48
    %81 = vmatprep.subr.mxu0 0.0
    %82 = vmatpush1.msra.mxu0 %v49
    %83 = vmatprep.subr.mxu0 0.0
    %84 = vmatpush1.msra.mxu0 %v50
    %85 = vmatprep.subr.mxu0 0.0
    %86 = vmatpush1.msra.mxu0 %v51
    %87 = vmatprep.subr.mxu0 0.0
    %88 = vmatpush1.msra.mxu0 %v52
    %89 = vmatprep.subr.mxu0 0.0
    %90 = vmatpush1.msra.mxu0 %v53
    %91 = vmatprep.subr.mxu0 0.0
    %92 = vmatpush1.msra.mxu0 %v54
    %93 = vmatprep.subr.mxu0 0.0
    %94 = vmatpush1.msra.mxu0 %v55
    %95 = vmatprep.subr.mxu0 0.0
    %96 = vmatpush1.msra.mxu0 0.0
    %97 = vmatprep.subr.mxu0 0.0
    %98 = vmatpush1.msra.mxu0 0.0
    %99 = vmatprep.subr.mxu0 0.0
    %100 = vmatpush1.msra.mxu0 0.0
    %101 = vmatprep.subr.mxu0 0.0
    %102 = vmatpush1.msra.mxu0 0.0
    %103 = vmatprep.subr.mxu0 0.0
    %104 = vmatpush1.msra.mxu0 0.0
    %105 = vmatprep.subr.mxu0 0.0
    %106 = vmatpush1.msra.mxu0 0.0
    %107 = vmatprep.subr.mxu0 0.0
    %108 = vmatpush1.msra.mxu0 0.0
    %109 = vmatprep.subr.mxu0 0.0
    %110 = vmatpush1.msra.mxu0 0.0
    %111 = vmatprep.subr.mxu0 0.0
    %112 = vmatpush1.msra.mxu0 0.0
    %113 = vmatprep.subr.mxu0 0.0
    %114 = vmatpush1.msra.mxu0 0.0
    %115 = vmatprep.subr.mxu0 0.0
    %116 = vmatpush1.msra.mxu0 0.0
    %117 = vmatprep.subr.mxu0 0.0
    %118 = vmatpush1.msra.mxu0 0.0
    %119 = vmatprep.subr.mxu0 0.0
    %120 = vmatpush1.msra.mxu0 0.0
    %121 = vmatprep.subr.mxu0 0.0
    %122 = vmatpush1.msra.mxu0 0.0
    %123 = vmatprep.subr.mxu0 0.0
    %124 = vmatpush1.msra.mxu0 0.0
    %125 = vmatprep.subr.mxu0 0.0
    %126 = vmatpush1.msra.mxu0 0.0
    %127 = vmatprep.mubr.f32.mxu0 0.0
    %128 = vmatmul.mubr.f32.gmra.mrb[0].mxu0 %v39
    %v129 = vpop.f32.mrb[0].mxu0
    %v130 = vadd.f32 %v61, %v129
    %v131 = vpop.f32.mrb[0].mxu0
    %132 = vdwg.mxu0
    %v133 = vmax.f32 %v130, 0.0
    %v134 = vld [vmem:[#allocation2] sm:$0xff]
    %v135 = vld [vmem:[#allocation3] sm:$0xff]
    %v136 = vld [vmem:[#allocation3 + $0x8] sm:$0xff]
    %v137 = vld [vmem:[#allocation3 + $0x10] sm:$0xff]
    %v138 = vld [vmem:[#allocation3 + $0x18] sm:$0xff]
    %v139 = vld [vmem:[#allocation3 + $0x20] sm:$0xff]
    %v140 = vld [vmem:[#allocation3 + $0x28] sm:$0xff]
    %v141 = vld [vmem:[#allocation3 + $0x30] sm:$0xff]
    %v142 = vld [vmem:[#allocation3 + $0x38] sm:$0xff]
    %v143 = vld [vmem:[#allocation3 + $0x40] sm:$0xff]
    %v144 = vld [vmem:[#allocation3 + $0x48] sm:$0xff]
    %v145 = vld [vmem:[#allocation3 + $0x50] sm:$0xff]
    %v146 = vld [vmem:[#allocation3 + $0x58] sm:$0xff]
    %v147 = vld [vmem:[#allocation3 + $0x60] sm:$0xff]
    %v148 = vld [vmem:[#allocation3 + $0x68] sm:$0xff]
    %v149 = vld [vmem:[#allocation3 + $0x70] sm:$0xff]
    %v150 = vld [vmem:[#allocation3 + $0x78] sm:$0xff]
    %151 = vmatprep.subr.mxu0 0.0
    %152 = vmatpush1.msra.mxu0 %v135
    %153 = vmatprep.subr.mxu0 0.0
    %154 = vmatpush1.msra.mxu0 %v136
    %155 = vmatprep.subr.mxu0 0.0
    %156 = vmatpush1.msra.mxu0 %v137
    %157 = vmatprep.subr.mxu0 0.0
    %158 = vmatpush1.msra.mxu0 %v138
    %159 = vmatprep.subr.mxu0 0.0
    %160 = vmatpush1.msra.mxu0 %v139
    %161 = vmatprep.subr.mxu0 0.0
    %162 = vmatpush1.msra.mxu0 %v140
    %163 = vmatprep.subr.mxu0 0.0
    %164 = vmatpush1.msra.mxu0 %v141
    %165 = vmatprep.subr.mxu0 0.0
    %166 = vmatpush1.msra.mxu0 %v142
    %167 = vmatprep.subr.mxu0 0.0
    %168 = vmatpush1.msra.mxu0 %v143
    %169 = vmatprep.subr.mxu0 0.0
    %170 = vmatpush1.msra.mxu0 %v144
    %171 = vmatprep.subr.mxu0 0.0
    %172 = vmatpush1.msra.mxu0 %v145
    %173 = vmatprep.subr.mxu0 0.0
    %174 = vmatpush1.msra.mxu0 %v146
    %175 = vmatprep.subr.mxu0 0.0
    %176 = vmatpush1.msra.mxu0 %v147
    %177 = vmatprep.subr.mxu0 0.0
    %178 = vmatpush1.msra.mxu0 %v148
    %179 = vmatprep.subr.mxu0 0.0
    %180 = vmatpush1.msra.mxu0 %v149
    %181 = vmatprep.subr.mxu0 0.0
    %182 = vmatpush1.msra.mxu0 %v150
    %183 = vmatprep.subr.mxu0 0.0
    %184 = vmatpush1.msra.mxu0 0.0
    %185 = vmatprep.subr.mxu0 0.0
    %186 = vmatpush1.msra.mxu0 0.0
    %187 = vmatprep.subr.mxu0 0.0
    %188 = vmatpush1.msra.mxu0 0.0
    %189 = vmatprep.subr.mxu0 0.0
    %190 = vmatpush1.msra.mxu0 0.0
    %191 = vmatprep.subr.mxu0 0.0
    %192 = vmatpush1.msra.mxu0 0.0
    %193 = vmatprep.subr.mxu0 0.0
    %194 = vmatpush1.msra.mxu0 0.0
    %195 = vmatprep.subr.mxu0 0.0
    %196 = vmatpush1.msra.mxu0 0.0
    %197 = vmatprep.subr.mxu0 0.0
    %198 = vmatpush1.msra.mxu0 0.0
    %199 = vmatprep.subr.mxu0 0.0
    %200 = vmatpush1.msra.mxu0 0.0
    %201 = vmatprep.subr.mxu0 0.0
    %202 = vmatpush1.msra.mxu0 0.0
    %203 = vmatprep.subr.mxu0 0.0
    %204 = vmatpush1.msra.mxu0 0.0
    %205 = vmatprep.subr.mxu0 0.0
    %206 = vmatpush1.msra.mxu0 0.0
    %207 = vmatprep.subr.mxu0 0.0
    %208 = vmatpush1.msra.mxu0 0.0
    %209 = vmatprep.subr.mxu0 0.0
    %210 = vmatpush1.msra.mxu0 0.0
    %211 = vmatprep.subr.mxu0 0.0
    %212 = vmatpush1.msra.mxu0 0.0
    %213 = vmatprep.subr.mxu0 0.0
    %214 = vmatpush1.msra.mxu0 0.0
    %215 = vmatprep.mubr.f32.mxu0 0.0
    %216 = vmatmul.mubr.f32.gmra.mrb[0].mxu0 %v133
    %v217 = vpop.f32.mrb[0].mxu0
    %v218 = vadd.f32 0.0, %v217
    %v219 = vpop.f32.mrb[0].mxu0
    %220 = vdwg.mxu0
    %v221 = vadd.f32 %v134, %v218
    %222 = vst [vmem:[#allocation2] sm:$0xff] %v221
    // Predicated region
    $region30: #{global_critics_forward.1} parent=1 // pred_check
      %p223 = pneg %p34
    $region31: #{global_critics_forward.1} parent=1 // pred_check_branch
      %225 = sbr.rel (%p223) target = $region33
    $region32: #{global_critics_forward.1} parent=1 // pred_region
      %v226 = vld [vmem:[#allocation2] sm:$0xff]
      %v227 = vld [vmem:[%s4] sm:$0x1]
      %v229 = vlaneseq
      %v230 = vshrl.u32 %v229, 7
      %v231 = vsub.s32 0, %v230
      %v232 = vrot.slane %v227, %v231
      %v234 = vadd.f32 %v226, %v232
      %v235 = vmax.f32 %v234, 0.0
      %236 = vst [vmem:[%s5] sm:$0xff] %v235
    $region33: #{global_critics_forward.1} parent=1 // pred_fallthru
      _
    // Predicated region
    $region34: #{global_critics_forward.1} parent=1 // pred_check
      _
    $region35: #{global_critics_forward.1} parent=1 // pred_check_branch
      %238 = sbr.rel (0) target = $region37
    $region36: #{global_critics_forward.1} parent=1 // pred_region
      _
    $region37: #{global_critics_forward.1} parent=1 // pred_fallthru
      _
    // Predicated region
    $region38: #{global_critics_forward.1} parent=1 // pred_check
      _
    $region39: #{global_critics_forward.1} parent=1 // pred_check_branch
      %240 = sbr.rel (0) target = $region41
    $region40: #{global_critics_forward.1} parent=1 // pred_region
      _
    $region41: #{global_critics_forward.1} parent=1 // pred_fallthru
      _
    %241 = vsyncpa [#allocation4], 1

</llo_original>
